<compile_context>
chip_gen: v5e
topology: v5e:2x2
jax: 0.10.0
libtpu: 0.0.40
codegen_flags: <defaults>
</compile_context>

<pallas_src>
import jax
import jax.numpy as jnp
from jax.experimental import pallas as pl
from jax.experimental.pallas import tpu as pltpu

IN_DIM = 28 * 28      # 784
HIDDEN_DIM = 128
OUT_DIM = 10

LANE = 128
SUBLANE = 8
# f32 x tile (2048 x 784 x 4B ~= 6.1 MiB) double-buffered + f32 out tile
# (2048 x 128 x 4B ~= 1 MiB, double-buffered) + resident bf16 weights
# (~0.23 MiB) ~= 15 MiB, comfortably under the 32 MiB scoped VMEM we request.
MAX_TILE_B = 2048
# Split the batch into >= 2 tiles above this so v7x's 2nd TensorCore is used
# (on v5e/v6e the extra grid step is just a cheap serial iteration).
MIN_SPLIT_B = 256


def _round_up(n, m):
    return (n + m - 1) // m * m


def _backbone_kernel(x_ref, w1_ref, b1_ref, w2_ref, b2_ref, o_ref):
    # x arrives as f32 straight from HBM (read once); cast to bf16 in-kernel
    # (VPU cast hides under the x DMA / MXU work).
    x_bf16 = x_ref[...].astype(jnp.bfloat16)
    # First linear: bf16 operands on the MXU, f32 accumulation; ragged K=784.
    h = jnp.dot(x_bf16, w1_ref[...], preferred_element_type=jnp.float32)
    h = jnp.maximum(h + b1_ref[...], 0.0)              # bias + ReLU in f32 (VPU)
    # Second linear: lane-dense 128-wide head (padded columns are zeros).
    o = jnp.dot(h.astype(w2_ref.dtype), w2_ref[...],
                preferred_element_type=jnp.float32)
    o = jnp.maximum(o + b2_ref[...], 0.0)
    o_ref[...] = o.astype(o_ref.dtype)


def backbone_forward(x_nchw, w1, b1, w2, b2):
    """x_nchw: [B, 1, 28, 28] f32. w1: [784, H], b1: [H], w2: [H, 10], b2: [10].
    Returns [B, 10] f32 = relu(relu(x @ w1 + b1) @ w2 + b2)."""
    B = x_nchw.shape[0]
    K, H = w1.shape
    N = w2.shape[1]

    H_pad = _round_up(H, LANE)    # 128 -> 128
    N_pad = _round_up(N, LANE)    # 10  -> 128: lane-dense output stores

    # Balanced batch tiling; >= 2 tiles for large B (v7x megacore).
    num_tiles = pl.cdiv(B, MAX_TILE_B)
    if B >= MIN_SPLIT_B:
        num_tiles = max(num_tiles, 2)
    if num_tiles == 1:
        tile_b = B                 # full-dim block: legal for any B, zero padding
    else:
        tile_b = _round_up(pl.cdiv(B, num_tiles), SUBLANE)
    B_pad = num_tiles * tile_b

    # --- plain-JAX glue: flatten only; x stays f32 and un-padded in K --------
    x = x_nchw.reshape(B, -1)
    if B_pad != B:
        # Only a few dead rows per tile (< one sublane group), rare in practice.
        x = jnp.pad(x, ((0, B_pad - B), (0, 0)))

    # Weights/biases: tiny one-time pads + casts; resident in VMEM.
    w1p = jnp.pad(w1, ((0, 0), (0, H_pad - H))).astype(jnp.bfloat16)
    b1p = jnp.pad(b1, (0, H_pad - H)).reshape(1, H_pad).astype(jnp.float32)
    w2p = jnp.pad(w2, ((0, H_pad - H), (0, N_pad - N))).astype(jnp.bfloat16)
    b2p = jnp.pad(b2, (0, N_pad - N)).reshape(1, N_pad).astype(jnp.float32)

    flops = 2 * B_pad * (K * H_pad + H_pad * N_pad)
    bytes_accessed = (x.size * 4 + w1p.size * 2 + w2p.size * 2
                      + b1p.size * 4 + b2p.size * 4 + B_pad * N_pad * 4)

    out = pl.pallas_call(
        _backbone_kernel,
        out_shape=jax.ShapeDtypeStruct((B_pad, N_pad), jnp.float32),
        grid_spec=pltpu.PrefetchScalarGridSpec(
            num_scalar_prefetch=0,
            grid=(num_tiles,),
            in_specs=[
                pl.BlockSpec((tile_b, K), lambda i: (i, 0)),      # x (pipelined)
                pl.BlockSpec((K, H_pad), lambda i: (0, 0)),       # W1 resident
                pl.BlockSpec((1, H_pad), lambda i: (0, 0)),       # b1 resident
                pl.BlockSpec((H_pad, N_pad), lambda i: (0, 0)),   # W2 resident
                pl.BlockSpec((1, N_pad), lambda i: (0, 0)),       # b2 resident
            ],
            out_specs=pl.BlockSpec((tile_b, N_pad), lambda i: (i, 0)),
        ),
        compiler_params=pltpu.CompilerParams(
            # Batch tiles are independent -> shard across TCs on v7x;
            # harmless serial loop on v5e/v6e.
            dimension_semantics=("parallel",),
            # Above v5e's 16 MiB scoped default so 2048-row f32 x tiles
            # double-buffer cleanly; well under physical VMEM on all gens.
            vmem_limit_bytes=32 * 1024 * 1024,
        ),
        cost_estimate=pl.CostEstimate(
            flops=flops, transcendentals=0, bytes_accessed=bytes_accessed),
    )(x, w1p, b1p, w2p, b2p)

    # Drop batch padding and the zero-padded head columns.
    return out[:B, :N]


def init_params(key, hidden_dim=HIDDEN_DIM):
    """Deterministic synthetic params (shapes match torch.nn.Linear, stored
    as [in, out] so the kernel computes y = x @ W + b directly)."""
    k1, k2, k3, k4 = jax.random.split(key, 4)
    lim1 = 1.0 / (IN_DIM ** 0.5)
    lim2 = 1.0 / (hidden_dim ** 0.5)
    w1 = jax.random.uniform(k1, (IN_DIM, hidden_dim), jnp.float32, -lim1, lim1)
    b1 = jax.random.uniform(k2, (hidden_dim,), jnp.float32, -lim1, lim1)
    w2 = jax.random.uniform(k3, (hidden_dim, OUT_DIM), jnp.float32, -lim2, lim2)
    b2 = jax.random.uniform(k4, (OUT_DIM,), jnp.float32, -lim2, lim2)
    return w1, b1, w2, b2


if __name__ == "__main__":
    key = jax.random.PRNGKey(0)
    k_x, k_p = jax.random.split(key)

    B = 2
    x = jax.random.normal(k_x, (B, 1, 28, 28), dtype=jnp.float32)  # NCHW
    w1, b1, w2, b2 = init_params(k_p)

    fwd = jax.jit(backbone_forward)
    out = jax.block_until_ready(fwd(x, w1, b1, w2, b2))

    # Pure-f32 reference of the PyTorch forward. bf16 MXU inputs with f32
    # accumulation stay within a few 1e-3 of f32 math at these magnitudes.
    ref = jnp.maximum(
        jnp.maximum(x.reshape(B, -1) @ w1 + b1, 0.0) @ w2 + b2, 0.0
    )
    assert out.shape == (B, OUT_DIM)
    assert jnp.allclose(out, ref, atol=2e-2, rtol=2e-2), (
        float(jnp.max(jnp.abs(out - ref))))

    print("KERNEL_OK")
</pallas_src>

<mosaic_0001>
module attributes {stable_mosaic.version = 11 : i64} {
  func.func @_backbone_kernel(%arg0: i32, %arg1: memref<2x784xf32, #tpu.memory_space<vmem>>, %arg2: memref<784x128xbf16, #tpu.memory_space<vmem>>, %arg3: memref<1x128xf32, #tpu.memory_space<vmem>>, %arg4: memref<128x128xbf16, #tpu.memory_space<vmem>>, %arg5: memref<1x128xf32, #tpu.memory_space<vmem>>, %arg6: memref<2x128xf32, #tpu.memory_space<vmem>>) attributes {dimension_semantics = [#tpu.dimension_semantics<parallel>], iteration_bounds = array<i64: 1>, scalar_prefetch = 0 : i64, scratch_operands = 0 : i64, tpu.core_type = #tpu.core_type<tc>, window_params = [{transform_indices = @transform_0, window_bounds = array<i64: 2, 784>}, {pipeline_mode = #tpu.pipeline_mode<synchronous>, transform_indices = @transform_1, window_bounds = array<i64: 784, 128>}, {pipeline_mode = #tpu.pipeline_mode<synchronous>, transform_indices = @transform_2, window_bounds = array<i64: 1, 128>}, {pipeline_mode = #tpu.pipeline_mode<synchronous>, transform_indices = @transform_3, window_bounds = array<i64: 128, 128>}, {pipeline_mode = #tpu.pipeline_mode<synchronous>, transform_indices = @transform_4, window_bounds = array<i64: 1, 128>}, {transform_indices = @transform_5, window_bounds = array<i64: 2, 128>}]} {
    %c0 = arith.constant 0 : index
    %c0_0 = arith.constant 0 : index
    %0 = vector.load %arg1[%c0, %c0_0] : memref<2x784xf32, #tpu.memory_space<vmem>>, vector<2x784xf32>
    %1 = arith.truncf %0 : vector<2x784xf32> to vector<2x784xbf16>
    %c0_1 = arith.constant 0 : index
    %c0_2 = arith.constant 0 : index
    %2 = vector.load %arg2[%c0_1, %c0_2] : memref<784x128xbf16, #tpu.memory_space<vmem>>, vector<784x128xbf16>
    %cst = arith.constant dense<0.000000e+00> : vector<2x128xf32>
    %3 = tpu.matmul %1, %2, %cst {dimension_numbers = #tpu.dot_dimension_numbers<[1], [0], [0], [1], [0, 0, 1, 1], [], []>} : vector<2x784xbf16>, vector<784x128xbf16>, vector<2x128xf32> -> vector<2x128xf32>
    %c0_3 = arith.constant 0 : index
    %c0_4 = arith.constant 0 : index
    %4 = vector.load %arg3[%c0_3, %c0_4] : memref<1x128xf32, #tpu.memory_space<vmem>>, vector<1x128xf32>
    %5 = vector.broadcast %4 : vector<1x128xf32> to vector<2x128xf32>
    %6 = arith.addf %3, %5 : vector<2x128xf32>
    %cst_5 = arith.constant 0.000000e+00 : f32
    %7 = vector.broadcast %cst_5 : f32 to vector<2x128xf32>
    %8 = arith.maximumf %6, %7 : vector<2x128xf32>
    %9 = arith.truncf %8 : vector<2x128xf32> to vector<2x128xbf16>
    %c0_6 = arith.constant 0 : index
    %c0_7 = arith.constant 0 : index
    %10 = vector.load %arg4[%c0_6, %c0_7] : memref<128x128xbf16, #tpu.memory_space<vmem>>, vector<128x128xbf16>
    %cst_8 = arith.constant dense<0.000000e+00> : vector<2x128xf32>
    %11 = tpu.matmul %9, %10, %cst_8 {dimension_numbers = #tpu.dot_dimension_numbers<[1], [0], [0], [1], [0, 0, 1, 1], [], []>} : vector<2x128xbf16>, vector<128x128xbf16>, vector<2x128xf32> -> vector<2x128xf32>
    %c0_9 = arith.constant 0 : index
    %c0_10 = arith.constant 0 : index
    %12 = vector.load %arg5[%c0_9, %c0_10] : memref<1x128xf32, #tpu.memory_space<vmem>>, vector<1x128xf32>
    %13 = vector.broadcast %12 : vector<1x128xf32> to vector<2x128xf32>
    %14 = arith.addf %11, %13 : vector<2x128xf32>
    %cst_11 = arith.constant 0.000000e+00 : f32
    %15 = vector.broadcast %cst_11 : f32 to vector<2x128xf32>
    %16 = arith.maximumf %14, %15 : vector<2x128xf32>
    %c0_12 = arith.constant 0 : index
    %c0_13 = arith.constant 0 : index
    %17 = vector.load %arg6[%c0_12, %c0_13] : memref<2x128xf32, #tpu.memory_space<vmem>>, vector<2x128xf32>
    tpu.vector_store %arg6[%c0_12, %c0_13], %16 {strides = array<i32>} : memref<2x128xf32, #tpu.memory_space<vmem>>, vector<2x128xf32>,
    return
  }
  func.func @transform_0(%arg0: i32) -> (i32, i32) {
    %c0_i32 = arith.constant 0 : i32
    %c0_i32_0 = arith.constant 0 : i32
    return %arg0, %c0_i32 : i32, i32
  }
  func.func @transform_1(%arg0: i32) -> (i32, i32) {
    %c0_i32 = arith.constant 0 : i32
    %c0_i32_0 = arith.constant 0 : i32
    %c0_i32_1 = arith.constant 0 : i32
    return %c0_i32, %c0_i32_0 : i32, i32
  }
  func.func @transform_2(%arg0: i32) -> (i32, i32) {
    %c0_i32 = arith.constant 0 : i32
    %c0_i32_0 = arith.constant 0 : i32
    %c0_i32_1 = arith.constant 0 : i32
    return %c0_i32, %c0_i32_0 : i32, i32
  }
  func.func @transform_3(%arg0: i32) -> (i32, i32) {
    %c0_i32 = arith.constant 0 : i32
    %c0_i32_0 = arith.constant 0 : i32
    %c0_i32_1 = arith.constant 0 : i32
    return %c0_i32, %c0_i32_0 : i32, i32
  }
  func.func @transform_4(%arg0: i32) -> (i32, i32) {
    %c0_i32 = arith.constant 0 : i32
    %c0_i32_0 = arith.constant 0 : i32
    %c0_i32_1 = arith.constant 0 : i32
    return %c0_i32, %c0_i32_0 : i32, i32
  }
  func.func @transform_5(%arg0: i32) -> (i32, i32) {
    %c0_i32 = arith.constant 0 : i32
    %c0_i32_0 = arith.constant 0 : i32
    return %arg0, %c0_i32 : i32, i32
  }
}

</mosaic_0001>

<llo_original>
// kernel: backbone_forward.1
$region0: #{backbone_forward.1}
  #allocation0 [shape = 'u32[]', space=smem, size = 0x4, offset = 0x4, fixed_abs, tag = 'smem constant byte address 0x4 - core index']
  #allocation1 [shape = 'u32[72,128]{1,0:T(1,128)}', space=vmem, size = 0x9000, scoped, tag = 'internal scratch']
  %s0 = inlined_call_operand.vmem [shape: f32[2,784], index: 0, kind: input, shape index: {}]
  %s1 = inlined_call_operand.vmem [shape: bf16[784,128], index: 1, kind: input, shape index: {}]
  %s2 = inlined_call_operand.vmem [shape: f32[1,128], index: 2, kind: input, shape index: {}]
  %s3 = inlined_call_operand.vmem [shape: bf16[128,128], index: 3, kind: input, shape index: {}]
  %s4 = inlined_call_operand.vmem [shape: f32[1,128], index: 4, kind: input, shape index: {}]
  %s5 = inlined_call_operand.hbm [shape: f32[2,128], index: 5, kind: output, shape index: {}]
  %s6 = sld [smem:[#allocation0]]
  $region30: #{backbone_forward.1} parent=0
    _
  %s8 = ssub.s32 1, %s6
  %s9 = scalar_select 0, %s8, %s6
  $region1: #{backbone_forward.1} parent=0
    #allocation2 [shape = 'u8[1024]{0}', space=vmem, size = 0x400, scoped, tag = 'output window, operand 0, single buffered']
    #allocation3 [shape = 's32[1]{0}', space=sflag, size = 0x4, scoped, tag = 'scoped memory for backbone_forward.1']
    %10 = vsyncpa [#allocation3], 0
    // Predicated region
    $region2: #{backbone_forward.1} parent=1 // pred_check
      _
    $region3: #{backbone_forward.1} parent=1 // pred_check_branch
      %12 = sbr.rel (0) target = $region5
    $region4: #{backbone_forward.1} parent=1 // pred_region
      _
    $region5: #{backbone_forward.1} parent=1 // pred_fallthru
      _
    // Predicated region
    $region6: #{backbone_forward.1} parent=1 // pred_check
      _
    $region7: #{backbone_forward.1} parent=1 // pred_check_branch
      %14 = sbr.rel (0) target = $region9
    $region8: #{backbone_forward.1} parent=1 // pred_region
      _
    $region9: #{backbone_forward.1} parent=1 // pred_fallthru
      _
    // Predicated region
    $region10: #{backbone_forward.1} parent=1 // pred_check
      _
    $region11: #{backbone_forward.1} parent=1 // pred_check_branch
      %16 = sbr.rel (0) target = $region13
    $region12: #{backbone_forward.1} parent=1 // pred_region
      _
    $region13: #{backbone_forward.1} parent=1 // pred_fallthru
      _
    // Predicated region
    $region14: #{backbone_forward.1} parent=1 // pred_check
      _
    $region15: #{backbone_forward.1} parent=1 // pred_check_branch
      %18 = sbr.rel (0) target = $region17
    $region16: #{backbone_forward.1} parent=1 // pred_region
      _
    $region17: #{backbone_forward.1} parent=1 // pred_fallthru
      _
    // Predicated region
    $region18: #{backbone_forward.1} parent=1 // pred_check
      _
    $region19: #{backbone_forward.1} parent=1 // pred_check_branch
      %20 = sbr.rel (0) target = $region21
    $region20: #{backbone_forward.1} parent=1 // pred_region
      _
    $region21: #{backbone_forward.1} parent=1 // pred_fallthru
      _
    %v22 = vld [vmem:[%s0] sm:$0xff]
    %v23 = vld [vmem:[%s0 + $0x8] sm:$0x3f]
    %26 = vst [vmem:[#allocation1] ss:$4 sm:$0xff] %v22
    %s27 = scalar_lea.vmem [#allocation1], 32
    %28 = vst [vmem:[%s27] ss:$4 sm:$0xff] %v23
    %v29 = vld.sshfl [vmem:[#allocation1] sm:$0xff pattern:$0x73625140]
    %v30 = vld.sshfl [vmem:[#allocation1 + $0x8] sm:$0xff pattern:$0x73625140]
    %v31 = vld.sshfl [vmem:[#allocation1 + $0x10] sm:$0xff pattern:$0x73625140]
    %v32 = vld.sshfl [vmem:[#allocation1 + $0x18] sm:$0xff pattern:$0x73625140]
    %v33 = vld.sshfl [vmem:[#allocation1 + $0x20] sm:$0xff pattern:$0x73625140]
    %v34 = vld.sshfl [vmem:[#allocation1 + $0x28] sm:$0xff pattern:$0x73625140]
    %v35 = vld.sshfl [vmem:[#allocation1 + $0x30] sm:$0xff pattern:$0x73625140]
    %v43 = vpack.c.bf16 %v29, %v29
    %v44 = vpack.c.bf16 %v30, %v30
    %v45 = vpack.c.bf16 %v31, %v31
    %v46 = vpack.c.bf16 %v32, %v32
    %v47 = vpack.c.bf16 %v33, %v33
    %v48 = vpack.c.bf16 %v34, %v34
    %v49 = vpack.c.bf16 %v35, %v35
    %v50 = vld [vmem:[%s1] sm:$0xf]
    %v51 = vld [vmem:[%s1 + $0x4] sm:$0xf]
    %v52 = vld [vmem:[%s1 + $0x8] sm:$0xf]
    %v53 = vld [vmem:[%s1 + $0xc] sm:$0xf]
    %v54 = vld [vmem:[%s1 + $0x10] sm:$0xf]
    %v55 = vld [vmem:[%s1 + $0x14] sm:$0xf]
    %v56 = vld [vmem:[%s1 + $0x18] sm:$0xf]
    %v57 = vld [vmem:[%s1 + $0x1c] sm:$0xf]
    %v58 = vld [vmem:[%s1 + $0x20] sm:$0xf]
    %v59 = vld [vmem:[%s1 + $0x24] sm:$0xf]
    %v60 = vld [vmem:[%s1 + $0x28] sm:$0xf]
    %v61 = vld [vmem:[%s1 + $0x2c] sm:$0xf]
    %v62 = vld [vmem:[%s1 + $0x30] sm:$0xf]
    %v63 = vld [vmem:[%s1 + $0x34] sm:$0xf]
    %v64 = vld [vmem:[%s1 + $0x38] sm:$0xf]
    %v65 = vld [vmem:[%s1 + $0x3c] sm:$0xf]
    %v66 = vld [vmem:[%s1 + $0x40] sm:$0xf]
    %v67 = vld [vmem:[%s1 + $0x44] sm:$0xf]
    %v68 = vld [vmem:[%s1 + $0x48] sm:$0xf]
    %v69 = vld [vmem:[%s1 + $0x4c] sm:$0xf]
    %v70 = vld [vmem:[%s1 + $0x50] sm:$0xf]
    %v71 = vld [vmem:[%s1 + $0x54] sm:$0xf]
    %v72 = vld [vmem:[%s1 + $0x58] sm:$0xf]
    %v73 = vld [vmem:[%s1 + $0x5c] sm:$0xf]
    %v74 = vld [vmem:[%s1 + $0x60] sm:$0xf]
    %v75 = vld [vmem:[%s1 + $0x64] sm:$0xf]
    %v76 = vld [vmem:[%s1 + $0x68] sm:$0xf]
    %v77 = vld [vmem:[%s1 + $0x6c] sm:$0xf]
    %v78 = vld [vmem:[%s1 + $0x70] sm:$0xf]
    %v79 = vld [vmem:[%s1 + $0x74] sm:$0xf]
    %v80 = vld [vmem:[%s1 + $0x78] sm:$0xf]
    %v81 = vld [vmem:[%s1 + $0x7c] sm:$0xf]
    %v82 = vld [vmem:[%s1 + $0x80] sm:$0xf]
    %v83 = vld [vmem:[%s1 + $0x84] sm:$0xf]
    %v84 = vld [vmem:[%s1 + $0x88] sm:$0xf]
    %v85 = vld [vmem:[%s1 + $0x8c] sm:$0xf]
    %v86 = vld [vmem:[%s1 + $0x90] sm:$0xf]
    %v87 = vld [vmem:[%s1 + $0x94] sm:$0xf]
    %v88 = vld [vmem:[%s1 + $0x98] sm:$0xf]
    %v89 = vld [vmem:[%s1 + $0x9c] sm:$0xf]
    %v90 = vld [vmem:[%s1 + $0xa0] sm:$0xf]
    %v91 = vld [vmem:[%s1 + $0xa4] sm:$0xf]
    %v92 = vld [vmem:[%s1 + $0xa8] sm:$0xf]
    %v93 = vld [vmem:[%s1 + $0xac] sm:$0xf]
    %v94 = vld [vmem:[%s1 + $0xb0] sm:$0xf]
    %v95 = vld [vmem:[%s1 + $0xb4] sm:$0xf]
    %v96 = vld [vmem:[%s1 + $0xb8] sm:$0xf]
    %v97 = vld [vmem:[%s1 + $0xbc] sm:$0xf]
    %v98 = vld [vmem:[%s1 + $0xc0] sm:$0xf]
    %v99 = vld [vmem:[%s1 + $0xc4] sm:$0xf]
    %v100 = vld [vmem:[%s1 + $0xc8] sm:$0xf]
    %v101 = vld [vmem:[%s1 + $0xcc] sm:$0xf]
    %v102 = vld [vmem:[%s1 + $0xd0] sm:$0xf]
    %v103 = vld [vmem:[%s1 + $0xd4] sm:$0xf]
    %v104 = vld [vmem:[%s1 + $0xd8] sm:$0xf]
    %v105 = vld [vmem:[%s1 + $0xdc] sm:$0xf]
    %v106 = vld [vmem:[%s1 + $0xe0] sm:$0xf]
    %v107 = vld [vmem:[%s1 + $0xe4] sm:$0xf]
    %v108 = vld [vmem:[%s1 + $0xe8] sm:$0xf]
    %v109 = vld [vmem:[%s1 + $0xec] sm:$0xf]
    %v110 = vld [vmem:[%s1 + $0xf0] sm:$0xf]
    %v111 = vld [vmem:[%s1 + $0xf4] sm:$0xf]
    %v112 = vld [vmem:[%s1 + $0xf8] sm:$0xf]
    %v113 = vld [vmem:[%s1 + $0xfc] sm:$0xf]
    %v114 = vld [vmem:[%s1 + $0x100] sm:$0xf]
    %v115 = vld [vmem:[%s1 + $0x104] sm:$0xf]
    %v116 = vld [vmem:[%s1 + $0x108] sm:$0xf]
    %v117 = vld [vmem:[%s1 + $0x10c] sm:$0xf]
    %v118 = vld [vmem:[%s1 + $0x110] sm:$0xf]
    %v119 = vld [vmem:[%s1 + $0x114] sm:$0xf]
    %v120 = vld [vmem:[%s1 + $0x118] sm:$0xf]
    %v121 = vld [vmem:[%s1 + $0x11c] sm:$0xf]
    %v122 = vld [vmem:[%s1 + $0x120] sm:$0xf]
    %v123 = vld [vmem:[%s1 + $0x124] sm:$0xf]
    %v124 = vld [vmem:[%s1 + $0x128] sm:$0xf]
    %v125 = vld [vmem:[%s1 + $0x12c] sm:$0xf]
    %v126 = vld [vmem:[%s1 + $0x130] sm:$0xf]
    %v127 = vld [vmem:[%s1 + $0x134] sm:$0xf]
    %v128 = vld [vmem:[%s1 + $0x138] sm:$0xf]
    %v129 = vld [vmem:[%s1 + $0x13c] sm:$0xf]
    %v130 = vld [vmem:[%s1 + $0x140] sm:$0xf]
    %v131 = vld [vmem:[%s1 + $0x144] sm:$0xf]
    %v132 = vld [vmem:[%s1 + $0x148] sm:$0xf]
    %v133 = vld [vmem:[%s1 + $0x14c] sm:$0xf]
    %v134 = vld [vmem:[%s1 + $0x150] sm:$0xf]
    %v135 = vld [vmem:[%s1 + $0x154] sm:$0xf]
    %v136 = vld [vmem:[%s1 + $0x158] sm:$0xf]
    %v137 = vld [vmem:[%s1 + $0x15c] sm:$0xf]
    %v138 = vld [vmem:[%s1 + $0x160] sm:$0xf]
    %v139 = vld [vmem:[%s1 + $0x164] sm:$0xf]
    %v140 = vld [vmem:[%s1 + $0x168] sm:$0xf]
    %v141 = vld [vmem:[%s1 + $0x16c] sm:$0xf]
    %v142 = vld [vmem:[%s1 + $0x170] sm:$0xf]
    %v143 = vld [vmem:[%s1 + $0x174] sm:$0xf]
    %v144 = vld [vmem:[%s1 + $0x178] sm:$0xf]
    %v145 = vld [vmem:[%s1 + $0x17c] sm:$0xf]
    %v146 = vld [vmem:[%s1 + $0x180] sm:$0xf]
    %v147 = vld [vmem:[%s1 + $0x184] sm:$0xf]
    %v148 = vld [vmem:[%s2] sm:$0x1]
    %v150 = vperm.slane %v148, 0
    %v250 = vunpack.c.l.b16 %v50
    %v251 = vunpack.c.l.b16 %v51
    %v252 = vunpack.c.l.b16 %v52
    %v253 = vunpack.c.l.b16 %v53
    %v254 = vunpack.c.l.b16 %v54
    %v255 = vunpack.c.l.b16 %v55
    %v256 = vunpack.c.l.b16 %v56
    %v257 = vunpack.c.l.b16 %v57
    %v258 = vunpack.c.l.b16 %v58
    %v259 = vunpack.c.l.b16 %v59
    %v260 = vunpack.c.l.b16 %v60
    %v261 = vunpack.c.l.b16 %v61
    %v262 = vunpack.c.l.b16 %v62
    %v263 = vunpack.c.l.b16 %v63
    %v264 = vunpack.c.l.b16 %v64
    %v265 = vunpack.c.l.b16 %v65
    %v266 = vunpack.c.l.b16 %v66
    %v267 = vunpack.c.l.b16 %v67
    %v268 = vunpack.c.l.b16 %v68
    %v269 = vunpack.c.l.b16 %v69
    %v270 = vunpack.c.l.b16 %v70
    %v271 = vunpack.c.l.b16 %v71
    %v272 = vunpack.c.l.b16 %v72
    %v273 = vunpack.c.l.b16 %v73
    %v274 = vunpack.c.l.b16 %v74
    %v275 = vunpack.c.l.b16 %v75
    %v276 = vunpack.c.l.b16 %v76
    %v277 = vunpack.c.l.b16 %v77
    %v278 = vunpack.c.l.b16 %v78
    %v279 = vunpack.c.l.b16 %v79
    %v280 = vunpack.c.l.b16 %v80
    %v281 = vunpack.c.l.b16 %v81
    %v282 = vunpack.c.l.b16 %v82
    %v283 = vunpack.c.l.b16 %v83
    %v284 = vunpack.c.l.b16 %v84
    %v285 = vunpack.c.l.b16 %v85
    %v286 = vunpack.c.l.b16 %v86
    %v287 = vunpack.c.l.b16 %v87
    %v288 = vunpack.c.l.b16 %v88
    %v289 = vunpack.c.l.b16 %v89
    %v290 = vunpack.c.l.b16 %v90
    %v291 = vunpack.c.l.b16 %v91
    %v292 = vunpack.c.l.b16 %v92
    %v293 = vunpack.c.l.b16 %v93
    %v294 = vunpack.c.l.b16 %v94
    %v295 = vunpack.c.l.b16 %v95
    %v296 = vunpack.c.l.b16 %v96
    %v297 = vunpack.c.l.b16 %v97
    %v298 = vunpack.c.l.b16 %v98
    %v299 = vunpack.c.l.b16 %v99
    %v300 = vunpack.c.l.b16 %v100
    %v301 = vunpack.c.l.b16 %v101
    %v302 = vunpack.c.l.b16 %v102
    %v303 = vunpack.c.l.b16 %v103
    %v304 = vunpack.c.l.b16 %v104
    %v305 = vunpack.c.l.b16 %v105
    %v306 = vunpack.c.l.b16 %v106
    %v307 = vunpack.c.l.b16 %v107
    %v308 = vunpack.c.l.b16 %v108
    %v309 = vunpack.c.l.b16 %v109
    %v310 = vunpack.c.l.b16 %v110
    %v311 = vunpack.c.l.b16 %v111
    %v312 = vunpack.c.l.b16 %v112
    %v313 = vunpack.c.l.b16 %v113
    %v314 = vunpack.c.l.b16 %v114
    %v315 = vunpack.c.l.b16 %v115
    %v316 = vunpack.c.l.b16 %v116
    %v317 = vunpack.c.l.b16 %v117
    %v318 = vunpack.c.l.b16 %v118
    %v319 = vunpack.c.l.b16 %v119
    %v320 = vunpack.c.l.b16 %v120
    %v321 = vunpack.c.l.b16 %v121
    %v322 = vunpack.c.l.b16 %v122
    %v323 = vunpack.c.l.b16 %v123
    %v324 = vunpack.c.l.b16 %v124
    %v325 = vunpack.c.l.b16 %v125
    %v326 = vunpack.c.l.b16 %v126
    %v327 = vunpack.c.l.b16 %v127
    %v328 = vunpack.c.l.b16 %v128
    %v329 = vunpack.c.l.b16 %v129
    %v330 = vunpack.c.l.b16 %v130
    %v331 = vunpack.c.l.b16 %v131
    %v332 = vunpack.c.l.b16 %v132
    %v333 = vunpack.c.l.b16 %v133
    %v334 = vunpack.c.l.b16 %v134
    %v335 = vunpack.c.l.b16 %v135
    %v336 = vunpack.c.l.b16 %v136
    %v337 = vunpack.c.l.b16 %v137
    %v338 = vunpack.c.l.b16 %v138
    %v339 = vunpack.c.l.b16 %v139
    %v340 = vunpack.c.l.b16 %v140
    %v341 = vunpack.c.l.b16 %v141
    %v342 = vunpack.c.l.b16 %v142
    %v343 = vunpack.c.l.b16 %v143
    %v344 = vunpack.c.l.b16 %v144
    %v345 = vunpack.c.l.b16 %v145
    %v346 = vunpack.c.l.b16 %v146
    %v347 = vunpack.c.l.b16 %v147
    %v348 = vpack.c.b16 %v251, %v250
    %v349 = vpack.c.b16 %v253, %v252
    %v350 = vpack.c.b16 %v255, %v254
    %v351 = vpack.c.b16 %v257, %v256
    %v352 = vpack.c.b16 %v259, %v258
    %v353 = vpack.c.b16 %v261, %v260
    %v354 = vpack.c.b16 %v263, %v262
    %v355 = vpack.c.b16 %v265, %v264
    %v356 = vpack.c.b16 %v267, %v266
    %v357 = vpack.c.b16 %v269, %v268
    %v358 = vpack.c.b16 %v271, %v270
    %v359 = vpack.c.b16 %v273, %v272
    %v360 = vpack.c.b16 %v275, %v274
    %v361 = vpack.c.b16 %v277, %v276
    %v362 = vpack.c.b16 %v279, %v278
    %v363 = vpack.c.b16 %v281, %v280
    %v364 = vpack.c.b16 %v283, %v282
    %v365 = vpack.c.b16 %v285, %v284
    %v366 = vpack.c.b16 %v287, %v286
    %v367 = vpack.c.b16 %v289, %v288
    %v368 = vpack.c.b16 %v291, %v290
    %v369 = vpack.c.b16 %v293, %v292
    %v370 = vpack.c.b16 %v295, %v294
    %v371 = vpack.c.b16 %v297, %v296
    %v372 = vpack.c.b16 %v299, %v298
    %v373 = vpack.c.b16 %v301, %v300
    %v374 = vpack.c.b16 %v303, %v302
    %v375 = vpack.c.b16 %v305, %v304
    %v376 = vpack.c.b16 %v307, %v306
    %v377 = vpack.c.b16 %v309, %v308
    %v378 = vpack.c.b16 %v311, %v310
    %v379 = vpack.c.b16 %v313, %v312
    %v380 = vpack.c.b16 %v315, %v314
    %v381 = vpack.c.b16 %v317, %v316
    %v382 = vpack.c.b16 %v319, %v318
    %v383 = vpack.c.b16 %v321, %v320
    %v384 = vpack.c.b16 %v323, %v322
    %v385 = vpack.c.b16 %v325, %v324
    %v386 = vpack.c.b16 %v327, %v326
    %v387 = vpack.c.b16 %v329, %v328
    %v388 = vpack.c.b16 %v331, %v330
    %v389 = vpack.c.b16 %v333, %v332
    %v390 = vpack.c.b16 %v335, %v334
    %v391 = vpack.c.b16 %v337, %v336
    %v392 = vpack.c.b16 %v339, %v338
    %v393 = vpack.c.b16 %v341, %v340
    %v394 = vpack.c.b16 %v343, %v342
    %v395 = vpack.c.b16 %v345, %v344
    %v396 = vpack.c.b16 %v347, %v346
    %vm446 = vcmask 130048
    %v448 = vsel %vm446, %v49, 0
    %450 = vmatpush.bf16.msra.mxu0 %v355
    %451 = vmatpush.bf16.msra.mxu0 %v354
    %452 = vmatpush.bf16.msra.mxu0 %v353
    %453 = vmatpush.bf16.msra.mxu0 %v352
    %454 = vmatpush.bf16.msra.mxu0 %v351
    %455 = vmatpush.bf16.msra.mxu0 %v350
    %456 = vmatpush.bf16.msra.mxu0 %v349
    %457 = vmatpush.bf16.msra.mxu0 %v348
    %458 = vmatmul.bf16.gmra.mxu0 %v43
    %v459 = vpop.f32.mrf.mxu0
    %v460 = vadd.f32 %v150, %v459
    %v461 = vpop.f32.mrf.mxu0
    %462 = vdwg.mxu0
    %463 = vmatpush.bf16.msra.mxu0 %v363
    %464 = vmatpush.bf16.msra.mxu0 %v362
    %465 = vmatpush.bf16.msra.mxu0 %v361
    %466 = vmatpush.bf16.msra.mxu0 %v360
    %467 = vmatpush.bf16.msra.mxu0 %v359
    %468 = vmatpush.bf16.msra.mxu0 %v358
    %469 = vmatpush.bf16.msra.mxu0 %v357
    %470 = vmatpush.bf16.msra.mxu0 %v356
    %471 = vmatmul.bf16.gmra.mxu0 %v44
    %v472 = vpop.f32.mrf.mxu0
    %v473 = vadd.f32 %v460, %v472
    %v474 = vpop.f32.mrf.mxu0
    %475 = vdwg.mxu0
    %476 = vmatpush.bf16.msra.mxu0 %v371
    %477 = vmatpush.bf16.msra.mxu0 %v370
    %478 = vmatpush.bf16.msra.mxu0 %v369
    %479 = vmatpush.bf16.msra.mxu0 %v368
    %480 = vmatpush.bf16.msra.mxu0 %v367
    %481 = vmatpush.bf16.msra.mxu0 %v366
    %482 = vmatpush.bf16.msra.mxu0 %v365
    %483 = vmatpush.bf16.msra.mxu0 %v364
    %484 = vmatmul.bf16.gmra.mxu0 %v45
    %v485 = vpop.f32.mrf.mxu0
    %v486 = vadd.f32 %v473, %v485
    %v487 = vpop.f32.mrf.mxu0
    %488 = vdwg.mxu0
    %489 = vmatpush.bf16.msra.mxu0 %v379
    %490 = vmatpush.bf16.msra.mxu0 %v378
    %491 = vmatpush.bf16.msra.mxu0 %v377
    %492 = vmatpush.bf16.msra.mxu0 %v376
    %493 = vmatpush.bf16.msra.mxu0 %v375
    %494 = vmatpush.bf16.msra.mxu0 %v374
    %495 = vmatpush.bf16.msra.mxu0 %v373
    %496 = vmatpush.bf16.msra.mxu0 %v372
    %497 = vmatmul.bf16.gmra.mxu0 %v46
    %v498 = vpop.f32.mrf.mxu0
    %v499 = vadd.f32 %v486, %v498
    %v500 = vpop.f32.mrf.mxu0
    %501 = vdwg.mxu0
    %502 = vmatpush.bf16.msra.mxu0 %v387
    %503 = vmatpush.bf16.msra.mxu0 %v386
    %504 = vmatpush.bf16.msra.mxu0 %v385
    %505 = vmatpush.bf16.msra.mxu0 %v384
    %506 = vmatpush.bf16.msra.mxu0 %v383
    %507 = vmatpush.bf16.msra.mxu0 %v382
    %508 = vmatpush.bf16.msra.mxu0 %v381
    %509 = vmatpush.bf16.msra.mxu0 %v380
    %510 = vmatmul.bf16.gmra.mxu0 %v47
    %v511 = vpop.f32.mrf.mxu0
    %v512 = vadd.f32 %v499, %v511
    %v513 = vpop.f32.mrf.mxu0
    %514 = vdwg.mxu0
    %515 = vmatpush.bf16.msra.mxu0 %v395
    %516 = vmatpush.bf16.msra.mxu0 %v394
    %517 = vmatpush.bf16.msra.mxu0 %v393
    %518 = vmatpush.bf16.msra.mxu0 %v392
    %519 = vmatpush.bf16.msra.mxu0 %v391
    %520 = vmatpush.bf16.msra.mxu0 %v390
    %521 = vmatpush.bf16.msra.mxu0 %v389
    %522 = vmatpush.bf16.msra.mxu0 %v388
    %523 = vmatmul.bf16.gmra.mxu0 %v48
    %v524 = vpop.f32.mrf.mxu0
    %v525 = vadd.f32 %v512, %v524
    %v526 = vpop.f32.mrf.mxu0
    %527 = vdwg.mxu0
    %528 = vmatpush.bf16.msra.mxu0 0
    %529 = vmatpush.bf16.msra.mxu0 0
    %530 = vmatpush.bf16.msra.mxu0 0
    %531 = vmatpush.bf16.msra.mxu0 0
    %532 = vmatpush.bf16.msra.mxu0 0
    %533 = vmatpush.bf16.msra.mxu0 0
    %534 = vmatpush.bf16.msra.mxu0 0
    %535 = vmatpush.bf16.msra.mxu0 %v396
    %536 = vmatmul.bf16.gmra.mxu0 %v448
    %v537 = vpop.f32.mrf.mxu0
    %v538 = vadd.f32 %v525, %v537
    %v539 = vpop.f32.mrf.mxu0
    %540 = vdwg.mxu0
    %v541 = vmax.f32 %v538, 0.0
    %v542 = vpack.c.bf16 %v541, %v541
    %v543 = vld [vmem:[%s3] sm:$0xf]
    %v544 = vld [vmem:[%s3 + $0x4] sm:$0xf]
    %v545 = vld [vmem:[%s3 + $0x8] sm:$0xf]
    %v546 = vld [vmem:[%s3 + $0xc] sm:$0xf]
    %v547 = vld [vmem:[%s3 + $0x10] sm:$0xf]
    %v548 = vld [vmem:[%s3 + $0x14] sm:$0xf]
    %v549 = vld [vmem:[%s3 + $0x18] sm:$0xf]
    %v550 = vld [vmem:[%s3 + $0x1c] sm:$0xf]
    %v551 = vld [vmem:[%s3 + $0x20] sm:$0xf]
    %v552 = vld [vmem:[%s3 + $0x24] sm:$0xf]
    %v553 = vld [vmem:[%s3 + $0x28] sm:$0xf]
    %v554 = vld [vmem:[%s3 + $0x2c] sm:$0xf]
    %v555 = vld [vmem:[%s3 + $0x30] sm:$0xf]
    %v556 = vld [vmem:[%s3 + $0x34] sm:$0xf]
    %v557 = vld [vmem:[%s3 + $0x38] sm:$0xf]
    %v558 = vld [vmem:[%s3 + $0x3c] sm:$0xf]
    %v559 = vld [vmem:[%s4] sm:$0x1]
    %v561 = vperm.slane %v559, 0
    %v579 = vunpack.c.l.b16 %v543
    %v580 = vunpack.c.l.b16 %v544
    %v581 = vunpack.c.l.b16 %v545
    %v582 = vunpack.c.l.b16 %v546
    %v583 = vunpack.c.l.b16 %v547
    %v584 = vunpack.c.l.b16 %v548
    %v585 = vunpack.c.l.b16 %v549
    %v586 = vunpack.c.l.b16 %v550
    %v587 = vunpack.c.l.b16 %v551
    %v588 = vunpack.c.l.b16 %v552
    %v589 = vunpack.c.l.b16 %v553
    %v590 = vunpack.c.l.b16 %v554
    %v591 = vunpack.c.l.b16 %v555
    %v592 = vunpack.c.l.b16 %v556
    %v593 = vunpack.c.l.b16 %v557
    %v594 = vunpack.c.l.b16 %v558
    %v595 = vpack.c.b16 %v580, %v579
    %v596 = vpack.c.b16 %v582, %v581
    %v597 = vpack.c.b16 %v584, %v583
    %v598 = vpack.c.b16 %v586, %v585
    %v599 = vpack.c.b16 %v588, %v587
    %v600 = vpack.c.b16 %v590, %v589
    %v601 = vpack.c.b16 %v592, %v591
    %v602 = vpack.c.b16 %v594, %v593
    %611 = vmatpush.bf16.msra.mxu0 %v602
    %612 = vmatpush.bf16.msra.mxu0 %v601
    %613 = vmatpush.bf16.msra.mxu0 %v600
    %614 = vmatpush.bf16.msra.mxu0 %v599
    %615 = vmatpush.bf16.msra.mxu0 %v598
    %616 = vmatpush.bf16.msra.mxu0 %v597
    %617 = vmatpush.bf16.msra.mxu0 %v596
    %618 = vmatpush.bf16.msra.mxu0 %v595
    %619 = vmatmul.bf16.gmra.mxu0 %v542
    %v620 = vpop.f32.mrf.mxu0
    %v621 = vadd.f32 %v561, %v620
    %v622 = vpop.f32.mrf.mxu0
    %623 = vdwg.mxu0
    %v624 = vmax.f32 %v621, 0.0
    %625 = vst [vmem:[#allocation2] sm:$0x3] %v624
    // Predicated region
    $region22: #{backbone_forward.1} parent=1 // pred_check
      _
    $region23: #{backbone_forward.1} parent=1 // pred_check_branch
      %627 = sbr.rel (0) target = $region25
    $region24: #{backbone_forward.1} parent=1 // pred_region
      %629 = vsyncadd [#allocation3], 0
      %s631 = sshll.u32 [#allocation2], 4
      %s632 = int_to_ptr.vmem [resolvable:$true] %s631
      %s633 = sshll.u32 %s5, 4
      %s634 = int_to_ptr.hbm [resolvable:$true] %s633
      %636 = dma.vmem_to_hbm [thread:$0]  %s632, 32, %s634, [#allocation3]
    $region25: #{backbone_forward.1} parent=1 // pred_fallthru
      _
    // Predicated region
    $region26: #{backbone_forward.1} parent=1 // pred_check
      _
    $region27: #{backbone_forward.1} parent=1 // pred_check_branch
      %638 = sbr.rel (0) target = $region29
    $region28: #{backbone_forward.1} parent=1 // pred_region
      %640 = dma.done [#allocation3], 32
    $region29: #{backbone_forward.1} parent=1 // pred_fallthru
      _
    %641 = vsyncpa [#allocation3], 1

</llo_original>
